<compile_context>
chip_gen: v6e
topology: v6e:2x2x1
jax: 0.10.0
libtpu: 0.0.40
codegen_flags: <defaults>
</compile_context>

<pallas_src>
import functools

import jax
import jax.numpy as jnp
from jax.experimental import pallas as pl
from jax.experimental.pallas import tpu as pltpu


# ----------------------------- small helpers ------------------------------ #

def _round_up(n, m):
    return ((n + m - 1) // m) * m


def _sublane_multiple(dtype):
    size = jnp.dtype(dtype).itemsize
    if size >= 4:
        return 8
    if size == 2:
        return 16
    return 32


def _vmem_budget_bytes():
    """Generation-aware VMEM budget used for residency decisions and limits."""
    cap = 128 << 20
    try:
        info = pltpu.get_tpu_info()
        cap = int(getattr(info, "vmem_capacity_bytes", cap))
    except Exception:
        pass
    if cap <= (64 << 20):
        return 46 << 20        # v7x: 64 MiB per TensorCore, leave headroom
    return 100 << 20           # v5e / v6e: 128 MiB physical


def _vmem_limit(need_bytes, budget_bytes):
    # Explicit scoped-VMEM limit: requested need + 25% + 1 MiB for compiler
    # internal scratch, floored at 32 MiB, capped at the generation budget.
    return int(max(32 << 20, min(need_bytes * 5 // 4 + (1 << 20), budget_bytes)))


def _pick_feature_tile(fp):
    # Prefer 512/256-wide tiles (fills the 256-wide MXUs on v6e/v7x); fp is a
    # multiple of 128 so 128 always divides.
    for t in (512, 256, 128):
        if fp % t == 0:
            return t
    return 128


# -------------------------------- kernels --------------------------------- #

def _resident_kernel(x_ref, w_ref, b_ref, o_ref, acc_ref):
    """All L weight matrices resident in VMEM; statically unrolled layer chain.

    Weights are pre-transposed to (in_features, out_features), so each layer is
    a plain row-major matmul.  The activation lives in a f32 VMEM scratch
    (bounds register pressure; keeps full f32 precision between layers).
    """
    num_layers = w_ref.shape[0]
    acc_ref[...] = x_ref[...].astype(jnp.float32)
    for l in range(num_layers):                 # L static & small -> unrolled
        w = w_ref[l]                            # (Fp, Fp), (in, out) layout
        acc_ref[...] = jax.lax.dot_general(
            acc_ref[...].astype(w.dtype), w,
            dimension_numbers=(((1,), (0,)), ((), ())),
            preferred_element_type=jnp.float32,
        ) + b_ref[l]                            # (1, Fp) broadcast over rows
    o_ref[...] = acc_ref[...].astype(o_ref.dtype)


def _tiled_kernel(x_ref, w_ref, b_ref, o_ref, act_ref, acc_ref, *,
                  num_act_tiles, tile):
    """Large-F path: grid = (batch_tile, layer, N-tile, K-tile).

    Weights are streamed as (tile, tile) blocks; the activation of the current
    and next layer live in a flat ping-pong f32 VMEM scratch of shape
    (2*num_act_tiles, tb, tile); the K reduction goes through a f32 acc.
    """
    l = pl.program_id(1)
    n = pl.program_id(2)
    k = pl.program_id(3)
    num_k = pl.num_programs(3)

    src = jax.lax.rem(l, 2) * num_act_tiles     # read half of the ping-pong
    dst = num_act_tiles - src                   # write half

    # Seed the ping-pong buffer with the input batch tile (once per batch tile).
    @pl.when((l == 0) & (n == 0) & (k == 0))
    def _():
        for t in range(num_act_tiles):          # static slices, unrolled once
            act_ref[t] = x_ref[:, t * tile:(t + 1) * tile].astype(jnp.float32)

    @pl.when(k == 0)
    def _():
        acc_ref[...] = jnp.zeros_like(acc_ref)

    a_blk = act_ref[src + k]                    # (tb, tile) f32, layer-l input
    w_blk = w_ref[0]                            # (tile, tile), (in, out) layout
    acc_ref[...] += jax.lax.dot_general(
        a_blk.astype(w_blk.dtype), w_blk,
        dimension_numbers=(((1,), (0,)), ((), ())),
        preferred_element_type=jnp.float32,
    )

    @pl.when(k == num_k - 1)
    def _():
        y = acc_ref[...] + b_ref[0]             # (tb, tile) + (1, tile)
        act_ref[dst + n] = y                    # layer-(l+1) input
        # Write the output tile every layer: the final layer's write wins and
        # every write-back of this output block is fully initialised.
        o_ref[...] = y.astype(o_ref.dtype)


# ----------------------------- host-side API ------------------------------- #

def prepare_params(weights, biases, *, param_dtype=None):
    """One-time parameter preparation (hoisted out of the forward pass).

    weights: (L, F, F) in PyTorch (out_features, in_features) layout.
    biases:  (L, F)
    Returns (wt, bp): wt is (L, Fp, Fp) in (in, out) layout and param_dtype,
    bp is (L, 1, Fp) f32; Fp = round_up(F, 128).  Padding is zero, so results
    sliced back to F are exact.
    """
    L, F, F2 = weights.shape
    assert F == F2 and biases.shape == (L, F)
    if param_dtype is None:
        param_dtype = weights.dtype
    Fp = _round_up(max(F, 128), 128)
    wt = jnp.swapaxes(weights, 1, 2).astype(param_dtype)    # (L, in, out)
    bp = biases.astype(jnp.float32)
    if Fp != F:
        wt = jnp.pad(wt, ((0, 0), (0, Fp - F), (0, Fp - F)))
        bp = jnp.pad(bp, ((0, 0), (0, Fp - F)))
    return wt, bp.reshape(L, 1, Fp)


def rectangle_net_apply(x, wt, bp, *, force_tiled=False):
    """Forward pass.  `wt`, `bp` must come from `prepare_params`."""
    B, F = x.shape
    L, Fp, _ = wt.shape
    assert bp.shape == (L, 1, Fp) and F <= Fp

    wsize = jnp.dtype(wt.dtype).itemsize
    xsize = jnp.dtype(x.dtype).itemsize
    osize = xsize
    sub = max(_sublane_multiple(wt.dtype), _sublane_multiple(x.dtype))
    budget = _vmem_budget_bytes()
    out_dtype = x.dtype

    # ---------------- fully-resident path (small L * F * F) ---------------- #
    tb_res = _round_up(max(B, sub), sub) if B <= 256 else 256
    Bp_res = _round_up(max(B, sub), tb_res)
    resident_need = (
        2 * L * Fp * Fp * wsize        # weights   (x2: default double-buffer)
        + 2 * tb_res * Fp * xsize      # x block
        + 2 * L * Fp * 4               # biases
        + 2 * tb_res * Fp * osize      # output block
        + tb_res * Fp * 4              # f32 activation scratch
    )

    if resident_need <= budget - (2 << 20) and not force_tiled:
        xp = x
        if (Bp_res, Fp) != (B, F):
            xp = jnp.pad(x, ((0, Bp_res - B), (0, Fp - F)))
        out_p = pl.pallas_call(
            _resident_kernel,
            out_shape=jax.ShapeDtypeStruct((Bp_res, Fp), out_dtype),
            grid_spec=pltpu.PrefetchScalarGridSpec(
                num_scalar_prefetch=0,
                grid=(Bp_res // tb_res,),
                in_specs=[
                    pl.BlockSpec((tb_res, Fp), lambda b: (b, 0)),       # x
                    pl.BlockSpec((L, Fp, Fp), lambda b: (0, 0, 0)),     # all W
                    pl.BlockSpec((L, 1, Fp), lambda b: (0, 0, 0)),      # all b
                ],
                out_specs=pl.BlockSpec((tb_res, Fp), lambda b: (b, 0)),
                scratch_shapes=[pltpu.VMEM((tb_res, Fp), jnp.float32)],
            ),
            compiler_params=pltpu.CompilerParams(
                dimension_semantics=("parallel",),   # batch tiles -> v7x 2 TCs
                vmem_limit_bytes=_vmem_limit(resident_need, budget),
            ),
        )(xp, wt, bp)
        if (Bp_res, Fp) != (B, F):
            out_p = out_p[:B, :F]
        return out_p

    # --------------- tiled streamed path (large F fallback) ---------------- #
    tile = _pick_feature_tile(Fp)
    nt = Fp // tile

    tb = min(_round_up(max(B, sub), sub), 256)

    def _act_bytes(t):
        # VMEM terms that scale with the batch tile (x block, ping-pong
        # activations, output tile, accumulator).
        return t * Fp * (2 * xsize + 2 * 4) + 2 * t * tile * osize + t * tile * 4

    while tb > sub and _act_bytes(tb) > budget * 3 // 4:
        tb = _round_up(max(sub, tb // 2), sub)
    Bp = _round_up(max(B, sub), tb)

    tiled_need = (
        2 * tile * tile * wsize        # streamed weight block (double-buffered)
        + 2 * tile * 4                 # bias block
        + 2 * tb * Fp * xsize          # x batch tile
        + 2 * tb * tile * osize        # output tile
        + 2 * tb * Fp * 4              # f32 ping-pong activations
        + tb * tile * 4                # f32 accumulator
    )

    xp = x
    if (Bp, Fp) != (B, F):
        xp = jnp.pad(x, ((0, Bp - B), (0, Fp - F)))

    kernel = functools.partial(_tiled_kernel, num_act_tiles=nt, tile=tile)
    out_p = pl.pallas_call(
        kernel,
        out_shape=jax.ShapeDtypeStruct((Bp, Fp), out_dtype),
        grid_spec=pltpu.PrefetchScalarGridSpec(
            num_scalar_prefetch=0,
            grid=(Bp // tb, L, nt, nt),     # (batch, layer, N, K); K innermost
            in_specs=[
                pl.BlockSpec((tb, Fp), lambda b, l, n, k: (b, 0)),            # x
                pl.BlockSpec((1, tile, tile), lambda b, l, n, k: (l, k, n)),  # W
                pl.BlockSpec((1, 1, tile), lambda b, l, n, k: (l, 0, n)),     # b
            ],
            out_specs=pl.BlockSpec((tb, tile), lambda b, l, n, k: (b, n)),
            scratch_shapes=[
                pltpu.VMEM((2 * nt, tb, tile), jnp.float32),  # ping-pong acts
                pltpu.VMEM((tb, tile), jnp.float32),          # K accumulator
            ],
        ),
        compiler_params=pltpu.CompilerParams(
            dimension_semantics=("parallel", "arbitrary", "arbitrary", "arbitrary"),
            vmem_limit_bytes=_vmem_limit(tiled_need, budget),
        ),
    )(xp, wt, bp)
    if (Bp, Fp) != (B, F):
        out_p = out_p[:B, :F]
    return out_p


def rectangle_net(x, weights, biases, *, param_dtype=None, force_tiled=False):
    """Convenience wrapper: prepare params (one-time cost) + forward."""
    wt, bp = prepare_params(weights, biases, param_dtype=param_dtype)
    return rectangle_net_apply(x, wt, bp, force_tiled=force_tiled)


# ---------------------------------- demo ----------------------------------- #

if __name__ == "__main__":
    # Small shapes consistent with the module: F input features, L layers.
    B, F, L = 8, 32, 3

    key = jax.random.PRNGKey(0)
    kx, kw, kb = jax.random.split(key, 3)

    x = jax.random.normal(kx, (B, F), dtype=jnp.float32)
    # PyTorch Linear weight layout: (out_features, in_features).
    weights = 0.1 * jax.random.normal(kw, (L, F, F), dtype=jnp.float32)
    biases = 0.1 * jax.random.normal(kb, (L, F), dtype=jnp.float32)

    # Pure-JAX reference of the PyTorch forward: sequential x @ W.T + b.
    ref = x
    for l in range(L):
        ref = ref @ weights[l].T + biases[l]

    # Parameters prepared once; forward is jitted.
    wt, bp = prepare_params(weights, biases)
    fwd = jax.jit(rectangle_net_apply, static_argnames=("force_tiled",))

    # 1) f32 resident path (exact semantics of the PyTorch module).
    out = jax.block_until_ready(fwd(x, wt, bp))
    assert out.shape == (B, F)
    assert jnp.allclose(out, ref, atol=1e-5, rtol=1e-5), "resident path mismatch"

    # 2) Tiled streamed path (large-F code path), exercised at small shapes.
    out_t = jax.block_until_ready(fwd(x, wt, bp, force_tiled=True))
    assert jnp.allclose(out_t, ref, atol=1e-5, rtol=1e-5), "tiled path mismatch"

    # 3) bf16 weight streaming with f32 accumulation (activation rounded to
    #    bf16 before each matmul, so rounding compounds across layers).
    wt16, bp16 = prepare_params(weights, biases, param_dtype=jnp.bfloat16)
    out_bf = jax.block_until_ready(fwd(x, wt16, bp16))
    assert jnp.allclose(out_bf, ref, atol=5e-2, rtol=5e-2), "bf16 path mismatch"

    print("KERNEL_OK")
</pallas_src>

<mosaic_0001>
module attributes {stable_mosaic.version = 11 : i64} {
  func.func @_resident_kernel(%arg0: i32, %arg1: memref<8x128xf32, #tpu.memory_space<vmem>>, %arg2: memref<3x128x128xf32, #tpu.memory_space<vmem>>, %arg3: memref<3x1x128xf32, #tpu.memory_space<vmem>>, %arg4: memref<8x128xf32, #tpu.memory_space<vmem>>, %arg5: memref<8x128xf32, #tpu.memory_space<vmem>>) attributes {dimension_semantics = [#tpu.dimension_semantics<parallel>], iteration_bounds = array<i64: 1>, scalar_prefetch = 0 : i64, scratch_operands = 1 : i64, tpu.core_type = #tpu.core_type<tc>, window_params = [{transform_indices = @transform_0, window_bounds = array<i64: 8, 128>}, {pipeline_mode = #tpu.pipeline_mode<synchronous>, transform_indices = @transform_1, window_bounds = array<i64: 3, 128, 128>}, {pipeline_mode = #tpu.pipeline_mode<synchronous>, transform_indices = @transform_2, window_bounds = array<i64: 3, 1, 128>}, {transform_indices = @transform_3, window_bounds = array<i64: 8, 128>}]} {
    %c0 = arith.constant 0 : index
    %c0_0 = arith.constant 0 : index
    %0 = vector.load %arg1[%c0, %c0_0] : memref<8x128xf32, #tpu.memory_space<vmem>>, vector<8x128xf32>
    %c0_1 = arith.constant 0 : index
    %c0_2 = arith.constant 0 : index
    %1 = vector.load %arg5[%c0_1, %c0_2] : memref<8x128xf32, #tpu.memory_space<vmem>>, vector<8x128xf32>
    tpu.vector_store %arg5[%c0_1, %c0_2], %0 {strides = array<i32>} : memref<8x128xf32, #tpu.memory_space<vmem>>, vector<8x128xf32>,
    %c0_3 = arith.constant 0 : index
    %c0_4 = arith.constant 0 : index
    %c0_5 = arith.constant 0 : index
    %2 = vector.load %arg2[%c0_3, %c0_4, %c0_5] : memref<3x128x128xf32, #tpu.memory_space<vmem>>, vector<1x128x128xf32>
    %3 = vector.shape_cast %2 : vector<1x128x128xf32> to vector<128x128xf32>
    %c0_6 = arith.constant 0 : index
    %c0_7 = arith.constant 0 : index
    %4 = vector.load %arg5[%c0_6, %c0_7] : memref<8x128xf32, #tpu.memory_space<vmem>>, vector<8x128xf32>
    %cst = arith.constant dense<0.000000e+00> : vector<8x128xf32>
    %5 = tpu.matmul %4, %3, %cst {dimension_numbers = #tpu.dot_dimension_numbers<[1], [0], [0], [1], [0, 0, 1, 1], [], []>} : vector<8x128xf32>, vector<128x128xf32>, vector<8x128xf32> -> vector<8x128xf32>
    %c0_8 = arith.constant 0 : index
    %c0_9 = arith.constant 0 : index
    %c0_10 = arith.constant 0 : index
    %6 = vector.load %arg3[%c0_8, %c0_9, %c0_10] : memref<3x1x128xf32, #tpu.memory_space<vmem>>, vector<1x1x128xf32>
    %7 = vector.shape_cast %6 : vector<1x1x128xf32> to vector<1x128xf32>
    %8 = vector.broadcast %7 : vector<1x128xf32> to vector<8x128xf32>
    %9 = arith.addf %5, %8 : vector<8x128xf32>
    %c0_11 = arith.constant 0 : index
    %c0_12 = arith.constant 0 : index
    %10 = vector.load %arg5[%c0_11, %c0_12] : memref<8x128xf32, #tpu.memory_space<vmem>>, vector<8x128xf32>
    tpu.vector_store %arg5[%c0_11, %c0_12], %9 {strides = array<i32>} : memref<8x128xf32, #tpu.memory_space<vmem>>, vector<8x128xf32>,
    %c1 = arith.constant 1 : index
    %c0_13 = arith.constant 0 : index
    %c0_14 = arith.constant 0 : index
    %11 = vector.load %arg2[%c1, %c0_13, %c0_14] : memref<3x128x128xf32, #tpu.memory_space<vmem>>, vector<1x128x128xf32>
    %12 = vector.shape_cast %11 : vector<1x128x128xf32> to vector<128x128xf32>
    %c0_15 = arith.constant 0 : index
    %c0_16 = arith.constant 0 : index
    %13 = vector.load %arg5[%c0_15, %c0_16] : memref<8x128xf32, #tpu.memory_space<vmem>>, vector<8x128xf32>
    %cst_17 = arith.constant dense<0.000000e+00> : vector<8x128xf32>
    %14 = tpu.matmul %13, %12, %cst_17 {dimension_numbers = #tpu.dot_dimension_numbers<[1], [0], [0], [1], [0, 0, 1, 1], [], []>} : vector<8x128xf32>, vector<128x128xf32>, vector<8x128xf32> -> vector<8x128xf32>
    %c1_18 = arith.constant 1 : index
    %c0_19 = arith.constant 0 : index
    %c0_20 = arith.constant 0 : index
    %15 = vector.load %arg3[%c1_18, %c0_19, %c0_20] : memref<3x1x128xf32, #tpu.memory_space<vmem>>, vector<1x1x128xf32>
    %16 = vector.shape_cast %15 : vector<1x1x128xf32> to vector<1x128xf32>
    %17 = vector.broadcast %16 : vector<1x128xf32> to vector<8x128xf32>
    %18 = arith.addf %14, %17 : vector<8x128xf32>
    %c0_21 = arith.constant 0 : index
    %c0_22 = arith.constant 0 : index
    %19 = vector.load %arg5[%c0_21, %c0_22] : memref<8x128xf32, #tpu.memory_space<vmem>>, vector<8x128xf32>
    tpu.vector_store %arg5[%c0_21, %c0_22], %18 {strides = array<i32>} : memref<8x128xf32, #tpu.memory_space<vmem>>, vector<8x128xf32>,
    %c2 = arith.constant 2 : index
    %c0_23 = arith.constant 0 : index
    %c0_24 = arith.constant 0 : index
    %20 = vector.load %arg2[%c2, %c0_23, %c0_24] : memref<3x128x128xf32, #tpu.memory_space<vmem>>, vector<1x128x128xf32>
    %21 = vector.shape_cast %20 : vector<1x128x128xf32> to vector<128x128xf32>
    %c0_25 = arith.constant 0 : index
    %c0_26 = arith.constant 0 : index
    %22 = vector.load %arg5[%c0_25, %c0_26] : memref<8x128xf32, #tpu.memory_space<vmem>>, vector<8x128xf32>
    %cst_27 = arith.constant dense<0.000000e+00> : vector<8x128xf32>
    %23 = tpu.matmul %22, %21, %cst_27 {dimension_numbers = #tpu.dot_dimension_numbers<[1], [0], [0], [1], [0, 0, 1, 1], [], []>} : vector<8x128xf32>, vector<128x128xf32>, vector<8x128xf32> -> vector<8x128xf32>
    %c2_28 = arith.constant 2 : index
    %c0_29 = arith.constant 0 : index
    %c0_30 = arith.constant 0 : index
    %24 = vector.load %arg3[%c2_28, %c0_29, %c0_30] : memref<3x1x128xf32, #tpu.memory_space<vmem>>, vector<1x1x128xf32>
    %25 = vector.shape_cast %24 : vector<1x1x128xf32> to vector<1x128xf32>
    %26 = vector.broadcast %25 : vector<1x128xf32> to vector<8x128xf32>
    %27 = arith.addf %23, %26 : vector<8x128xf32>
    %c0_31 = arith.constant 0 : index
    %c0_32 = arith.constant 0 : index
    %28 = vector.load %arg5[%c0_31, %c0_32] : memref<8x128xf32, #tpu.memory_space<vmem>>, vector<8x128xf32>
    tpu.vector_store %arg5[%c0_31, %c0_32], %27 {strides = array<i32>} : memref<8x128xf32, #tpu.memory_space<vmem>>, vector<8x128xf32>,
    %c0_33 = arith.constant 0 : index
    %c0_34 = arith.constant 0 : index
    %29 = vector.load %arg5[%c0_33, %c0_34] : memref<8x128xf32, #tpu.memory_space<vmem>>, vector<8x128xf32>
    %c0_35 = arith.constant 0 : index
    %c0_36 = arith.constant 0 : index
    %30 = vector.load %arg4[%c0_35, %c0_36] : memref<8x128xf32, #tpu.memory_space<vmem>>, vector<8x128xf32>
    tpu.vector_store %arg4[%c0_35, %c0_36], %29 {strides = array<i32>} : memref<8x128xf32, #tpu.memory_space<vmem>>, vector<8x128xf32>,
    return
  }
  func.func @transform_0(%arg0: i32) -> (i32, i32) {
    %c0_i32 = arith.constant 0 : i32
    %c0_i32_0 = arith.constant 0 : i32
    return %arg0, %c0_i32 : i32, i32
  }
  func.func @transform_1(%arg0: i32) -> (i32, i32, i32) {
    %c0_i32 = arith.constant 0 : i32
    %c0_i32_0 = arith.constant 0 : i32
    %c0_i32_1 = arith.constant 0 : i32
    %c0_i32_2 = arith.constant 0 : i32
    return %c0_i32, %c0_i32_0, %c0_i32_1 : i32, i32, i32
  }
  func.func @transform_2(%arg0: i32) -> (i32, i32, i32) {
    %c0_i32 = arith.constant 0 : i32
    %c0_i32_0 = arith.constant 0 : i32
    %c0_i32_1 = arith.constant 0 : i32
    %c0_i32_2 = arith.constant 0 : i32
    return %c0_i32, %c0_i32_0, %c0_i32_1 : i32, i32, i32
  }
  func.func @transform_3(%arg0: i32) -> (i32, i32) {
    %c0_i32 = arith.constant 0 : i32
    %c0_i32_0 = arith.constant 0 : i32
    return %arg0, %c0_i32 : i32, i32
  }
}

</mosaic_0001>

<llo_original>
// kernel: rectangle_net_apply.1
$region0: #{rectangle_net_apply.1}
  #allocation0 [shape = 'u32[]', space=smem, size = 0x4, offset = 0x4, fixed_abs, tag = 'smem constant byte address 0x4 - core index']
  #allocation1 [shape = 'u32[144,128]{1,0:T(1,128)}', space=vmem, size = 0x12000, scoped, tag = 'internal scratch']
  #allocation2 [shape = 'f32[8,128]{1,0:T(8,128)}', space=vmem, size = 0x1000, scoped, tag = 'scratch operand']
  %s0 = inlined_call_operand.vmem [shape: f32[8,128], index: 0, kind: input, shape index: {}]
  %s1 = inlined_call_operand.hbm [shape: f32[3,128,128], index: 1, kind: input, shape index: {}]
  %s2 = inlined_call_operand.vmem [shape: f32[3,1,128], index: 2, kind: input, shape index: {}]
  %s3 = inlined_call_operand.hbm [shape: f32[8,128], index: 3, kind: output, shape index: {}]
  %s4 = sld [smem:[#allocation0]]
  $region26: #{rectangle_net_apply.1} parent=0
    _
  %s6 = ssub.s32 1, %s4
  %s7 = scalar_select 0, %s6, %s4
  $region1: #{rectangle_net_apply.1} parent=0
    #allocation3 [shape = 'u8[196608]{0}', space=vmem, size = 0x30000, scoped, tag = 'input window, operand 1, single buffered']
    #allocation4 [shape = 's32[1]{0}', space=sflag, size = 0x4, scoped, tag = 'scoped memory for rectangle_net_apply.1']
    #allocation5 [shape = 's32[1]{0}', space=sflag, size = 0x4, scoped, tag = 'scoped memory for rectangle_net_apply.1']
    #allocation6 [shape = 'u8[4096]{0}', space=vmem, size = 0x1000, scoped, tag = 'output window, operand 0, single buffered']
    %8 = vsyncpa [#allocation4], 0
    %9 = vsyncpa [#allocation5], 0
    // Predicated region
    $region2: #{rectangle_net_apply.1} parent=1 // pred_check
      _
    $region3: #{rectangle_net_apply.1} parent=1 // pred_check_branch
      %11 = sbr.rel (0) target = $region5
    $region4: #{rectangle_net_apply.1} parent=1 // pred_region
      _
    $region5: #{rectangle_net_apply.1} parent=1 // pred_fallthru
      _
    // Predicated region
    $region6: #{rectangle_net_apply.1} parent=1 // pred_check
      _
    $region7: #{rectangle_net_apply.1} parent=1 // pred_check_branch
      %13 = sbr.rel (0) target = $region9
    $region8: #{rectangle_net_apply.1} parent=1 // pred_region
      %s15 = ssub.s32 6144, 6144
      %16 = vsyncadd [#allocation4], %s15
      %s17 = sshll.u32 [#allocation3], 4
      %s18 = int_to_ptr.vmem [resolvable:$true] %s17
      %23 = dma.hbm_to_vmem [thread:$0]  %s1, 6144, %s18, [#allocation4], 128, 128, 8
    $region9: #{rectangle_net_apply.1} parent=1 // pred_fallthru
      _
    // Predicated region
    $region10: #{rectangle_net_apply.1} parent=1 // pred_check
      _
    $region11: #{rectangle_net_apply.1} parent=1 // pred_check_branch
      %25 = sbr.rel (0) target = $region13
    $region12: #{rectangle_net_apply.1} parent=1 // pred_region
      _
    $region13: #{rectangle_net_apply.1} parent=1 // pred_fallthru
      _
    // Predicated region
    $region14: #{rectangle_net_apply.1} parent=1 // pred_check
      _
    $region15: #{rectangle_net_apply.1} parent=1 // pred_check_branch
      %27 = sbr.rel (0) target = $region17
    $region16: #{rectangle_net_apply.1} parent=1 // pred_region
      %28 = dma.done [#allocation4], 6144
    $region17: #{rectangle_net_apply.1} parent=1 // pred_fallthru
      _
    %v29 = vld [vmem:[%s0] sm:$0xff]
    %30 = vst [vmem:[#allocation2] sm:$0xff] %v29
    %v31 = vld [vmem:[#allocation3] sm:$0xff]
    %v32 = vld [vmem:[#allocation3 + $0x8] sm:$0xff]
    %v33 = vld [vmem:[#allocation3 + $0x10] sm:$0xff]
    %v34 = vld [vmem:[#allocation3 + $0x18] sm:$0xff]
    %v35 = vld [vmem:[#allocation3 + $0x20] sm:$0xff]
    %v36 = vld [vmem:[#allocation3 + $0x28] sm:$0xff]
    %v37 = vld [vmem:[#allocation3 + $0x30] sm:$0xff]
    %v38 = vld [vmem:[#allocation3 + $0x38] sm:$0xff]
    %v39 = vld [vmem:[#allocation3 + $0x40] sm:$0xff]
    %v40 = vld [vmem:[#allocation3 + $0x48] sm:$0xff]
    %v41 = vld [vmem:[#allocation3 + $0x50] sm:$0xff]
    %v42 = vld [vmem:[#allocation3 + $0x58] sm:$0xff]
    %v43 = vld [vmem:[#allocation3 + $0x60] sm:$0xff]
    %v44 = vld [vmem:[#allocation3 + $0x68] sm:$0xff]
    %v45 = vld [vmem:[#allocation3 + $0x70] sm:$0xff]
    %v46 = vld [vmem:[#allocation3 + $0x78] sm:$0xff]
    %v47 = vld [vmem:[#allocation2] sm:$0xff]
    %v48 = vld [vmem:[%s2] sm:$0x1]
    %v50 = vlaneseq
    %v51 = vshrl.u32 %v50, 7
    %v52 = vsub.s32 0, %v51
    %v53 = vrot.slane %v48, %v52
    %55 = vmatprep.subr.mxu0 0.0
    %56 = vmatpush1.msra.mxu0 %v46
    %57 = vmatprep.subr.mxu0 0.0
    %58 = vmatpush1.msra.mxu0 %v45
    %59 = vmatprep.subr.mxu0 0.0
    %60 = vmatpush1.msra.mxu0 %v44
    %61 = vmatprep.subr.mxu0 0.0
    %62 = vmatpush1.msra.mxu0 %v43
    %63 = vmatprep.subr.mxu0 0.0
    %64 = vmatpush1.msra.mxu0 %v42
    %65 = vmatprep.subr.mxu0 0.0
    %66 = vmatpush1.msra.mxu0 %v41
    %67 = vmatprep.subr.mxu0 0.0
    %68 = vmatpush1.msra.mxu0 %v40
    %69 = vmatprep.subr.mxu0 0.0
    %70 = vmatpush1.msra.mxu0 %v39
    %71 = vmatprep.subr.mxu0 0.0
    %72 = vmatpush1.msra.mxu0 %v38
    %73 = vmatprep.subr.mxu0 0.0
    %74 = vmatpush1.msra.mxu0 %v37
    %75 = vmatprep.subr.mxu0 0.0
    %76 = vmatpush1.msra.mxu0 %v36
    %77 = vmatprep.subr.mxu0 0.0
    %78 = vmatpush1.msra.mxu0 %v35
    %79 = vmatprep.subr.mxu0 0.0
    %80 = vmatpush1.msra.mxu0 %v34
    %81 = vmatprep.subr.mxu0 0.0
    %82 = vmatpush1.msra.mxu0 %v33
    %83 = vmatprep.subr.mxu0 0.0
    %84 = vmatpush1.msra.mxu0 %v32
    %85 = vmatprep.subr.mxu0 0.0
    %86 = vmatpush1.msra.mxu0 %v31
    %87 = vmatprep.subr.mxu0 0.0
    %88 = vmatpush2.msra.mxu0 0.0
    %89 = vmatprep.subr.mxu0 0.0
    %90 = vmatpush2.msra.mxu0 0.0
    %91 = vmatprep.subr.mxu0 0.0
    %92 = vmatpush2.msra.mxu0 0.0
    %93 = vmatprep.subr.mxu0 0.0
    %94 = vmatpush2.msra.mxu0 0.0
    %95 = vmatprep.subr.mxu0 0.0
    %96 = vmatpush2.msra.mxu0 0.0
    %97 = vmatprep.subr.mxu0 0.0
    %98 = vmatpush2.msra.mxu0 0.0
    %99 = vmatprep.subr.mxu0 0.0
    %100 = vmatpush2.msra.mxu0 0.0
    %101 = vmatprep.subr.mxu0 0.0
    %102 = vmatpush2.msra.mxu0 0.0
    %103 = vmatprep.subr.mxu0 0.0
    %104 = vmatpush2.msra.mxu0 0.0
    %105 = vmatprep.subr.mxu0 0.0
    %106 = vmatpush2.msra.mxu0 0.0
    %107 = vmatprep.subr.mxu0 0.0
    %108 = vmatpush2.msra.mxu0 0.0
    %109 = vmatprep.subr.mxu0 0.0
    %110 = vmatpush2.msra.mxu0 0.0
    %111 = vmatprep.subr.mxu0 0.0
    %112 = vmatpush2.msra.mxu0 0.0
    %113 = vmatprep.subr.mxu0 0.0
    %114 = vmatpush2.msra.mxu0 0.0
    %115 = vmatprep.subr.mxu0 0.0
    %116 = vmatpush2.msra.mxu0 0.0
    %117 = vmatprep.subr.mxu0 0.0
    %118 = vmatpush2.msra.mxu0 0.0
    %119 = vmatprep.mubr.f32.mxu0 0.0
    %120 = vmatmul.mubr.f32.gmra.mxu0 %v47
    %v121 = vpop.f32.mrf.mxu0
    %v122 = vadd.f32 %v53, %v121
    %v123 = vpop.f32.mrf.mxu0
    %124 = vdwg.mxu0
    %125 = vst [vmem:[#allocation2] sm:$0xff] %v122
    %s126 = scalar_lea.vmem [#allocation3], 128
    %v127 = vld [vmem:[%s126] sm:$0xff]
    %v128 = vld [vmem:[%s126 + $0x8] sm:$0xff]
    %v129 = vld [vmem:[%s126 + $0x10] sm:$0xff]
    %v130 = vld [vmem:[%s126 + $0x18] sm:$0xff]
    %v131 = vld [vmem:[%s126 + $0x20] sm:$0xff]
    %v132 = vld [vmem:[%s126 + $0x28] sm:$0xff]
    %v133 = vld [vmem:[%s126 + $0x30] sm:$0xff]
    %v134 = vld [vmem:[%s126 + $0x38] sm:$0xff]
    %v135 = vld [vmem:[%s126 + $0x40] sm:$0xff]
    %v136 = vld [vmem:[%s126 + $0x48] sm:$0xff]
    %v137 = vld [vmem:[%s126 + $0x50] sm:$0xff]
    %v138 = vld [vmem:[%s126 + $0x58] sm:$0xff]
    %v139 = vld [vmem:[%s126 + $0x60] sm:$0xff]
    %v140 = vld [vmem:[%s126 + $0x68] sm:$0xff]
    %v141 = vld [vmem:[%s126 + $0x70] sm:$0xff]
    %v142 = vld [vmem:[%s126 + $0x78] sm:$0xff]
    %v143 = vld [vmem:[#allocation2] sm:$0xff]
    %s144 = scalar_lea.vmem %s2, 1
    %v145 = vld [vmem:[%s144] sm:$0x1]
    %v147 = vlaneseq
    %v148 = vshrl.u32 %v147, 7
    %v149 = vsub.s32 0, %v148
    %v150 = vrot.slane %v145, %v149
    %152 = vmatprep.subr.mxu0 0.0
    %153 = vmatpush1.msra.mxu0 %v142
    %154 = vmatprep.subr.mxu0 0.0
    %155 = vmatpush1.msra.mxu0 %v141
    %156 = vmatprep.subr.mxu0 0.0
    %157 = vmatpush1.msra.mxu0 %v140
    %158 = vmatprep.subr.mxu0 0.0
    %159 = vmatpush1.msra.mxu0 %v139
    %160 = vmatprep.subr.mxu0 0.0
    %161 = vmatpush1.msra.mxu0 %v138
    %162 = vmatprep.subr.mxu0 0.0
    %163 = vmatpush1.msra.mxu0 %v137
    %164 = vmatprep.subr.mxu0 0.0
    %165 = vmatpush1.msra.mxu0 %v136
    %166 = vmatprep.subr.mxu0 0.0
    %167 = vmatpush1.msra.mxu0 %v135
    %168 = vmatprep.subr.mxu0 0.0
    %169 = vmatpush1.msra.mxu0 %v134
    %170 = vmatprep.subr.mxu0 0.0
    %171 = vmatpush1.msra.mxu0 %v133
    %172 = vmatprep.subr.mxu0 0.0
    %173 = vmatpush1.msra.mxu0 %v132
    %174 = vmatprep.subr.mxu0 0.0
    %175 = vmatpush1.msra.mxu0 %v131
    %176 = vmatprep.subr.mxu0 0.0
    %177 = vmatpush1.msra.mxu0 %v130
    %178 = vmatprep.subr.mxu0 0.0
    %179 = vmatpush1.msra.mxu0 %v129
    %180 = vmatprep.subr.mxu0 0.0
    %181 = vmatpush1.msra.mxu0 %v128
    %182 = vmatprep.subr.mxu0 0.0
    %183 = vmatpush1.msra.mxu0 %v127
    %184 = vmatprep.subr.mxu0 0.0
    %185 = vmatpush2.msra.mxu0 0.0
    %186 = vmatprep.subr.mxu0 0.0
    %187 = vmatpush2.msra.mxu0 0.0
    %188 = vmatprep.subr.mxu0 0.0
    %189 = vmatpush2.msra.mxu0 0.0
    %190 = vmatprep.subr.mxu0 0.0
    %191 = vmatpush2.msra.mxu0 0.0
    %192 = vmatprep.subr.mxu0 0.0
    %193 = vmatpush2.msra.mxu0 0.0
    %194 = vmatprep.subr.mxu0 0.0
    %195 = vmatpush2.msra.mxu0 0.0
    %196 = vmatprep.subr.mxu0 0.0
    %197 = vmatpush2.msra.mxu0 0.0
    %198 = vmatprep.subr.mxu0 0.0
    %199 = vmatpush2.msra.mxu0 0.0
    %200 = vmatprep.subr.mxu0 0.0
    %201 = vmatpush2.msra.mxu0 0.0
    %202 = vmatprep.subr.mxu0 0.0
    %203 = vmatpush2.msra.mxu0 0.0
    %204 = vmatprep.subr.mxu0 0.0
    %205 = vmatpush2.msra.mxu0 0.0
    %206 = vmatprep.subr.mxu0 0.0
    %207 = vmatpush2.msra.mxu0 0.0
    %208 = vmatprep.subr.mxu0 0.0
    %209 = vmatpush2.msra.mxu0 0.0
    %210 = vmatprep.subr.mxu0 0.0
    %211 = vmatpush2.msra.mxu0 0.0
    %212 = vmatprep.subr.mxu0 0.0
    %213 = vmatpush2.msra.mxu0 0.0
    %214 = vmatprep.subr.mxu0 0.0
    %215 = vmatpush2.msra.mxu0 0.0
    %216 = vmatprep.mubr.f32.mxu0 0.0
    %217 = vmatmul.mubr.f32.gmra.mxu0 %v143
    %v218 = vpop.f32.mrf.mxu0
    %v219 = vadd.f32 %v150, %v218
    %v220 = vpop.f32.mrf.mxu0
    %221 = vdwg.mxu0
    %222 = vst [vmem:[#allocation2] sm:$0xff] %v219
    %s223 = scalar_lea.vmem [#allocation3], 256
    %v224 = vld [vmem:[%s223] sm:$0xff]
    %v225 = vld [vmem:[%s223 + $0x8] sm:$0xff]
    %v226 = vld [vmem:[%s223 + $0x10] sm:$0xff]
    %v227 = vld [vmem:[%s223 + $0x18] sm:$0xff]
    %v228 = vld [vmem:[%s223 + $0x20] sm:$0xff]
    %v229 = vld [vmem:[%s223 + $0x28] sm:$0xff]
    %v230 = vld [vmem:[%s223 + $0x30] sm:$0xff]
    %v231 = vld [vmem:[%s223 + $0x38] sm:$0xff]
    %v232 = vld [vmem:[%s223 + $0x40] sm:$0xff]
    %v233 = vld [vmem:[%s223 + $0x48] sm:$0xff]
    %v234 = vld [vmem:[%s223 + $0x50] sm:$0xff]
    %v235 = vld [vmem:[%s223 + $0x58] sm:$0xff]
    %v236 = vld [vmem:[%s223 + $0x60] sm:$0xff]
    %v237 = vld [vmem:[%s223 + $0x68] sm:$0xff]
    %v238 = vld [vmem:[%s223 + $0x70] sm:$0xff]
    %v239 = vld [vmem:[%s223 + $0x78] sm:$0xff]
    %v240 = vld [vmem:[#allocation2] sm:$0xff]
    %s241 = scalar_lea.vmem %s2, 2
    %v242 = vld [vmem:[%s241] sm:$0x1]
    %v244 = vlaneseq
    %v245 = vshrl.u32 %v244, 7
    %v246 = vsub.s32 0, %v245
    %v247 = vrot.slane %v242, %v246
    %249 = vmatprep.subr.mxu0 0.0
    %250 = vmatpush1.msra.mxu0 %v239
    %251 = vmatprep.subr.mxu0 0.0
    %252 = vmatpush1.msra.mxu0 %v238
    %253 = vmatprep.subr.mxu0 0.0
    %254 = vmatpush1.msra.mxu0 %v237
    %255 = vmatprep.subr.mxu0 0.0
    %256 = vmatpush1.msra.mxu0 %v236
    %257 = vmatprep.subr.mxu0 0.0
    %258 = vmatpush1.msra.mxu0 %v235
    %259 = vmatprep.subr.mxu0 0.0
    %260 = vmatpush1.msra.mxu0 %v234
    %261 = vmatprep.subr.mxu0 0.0
    %262 = vmatpush1.msra.mxu0 %v233
    %263 = vmatprep.subr.mxu0 0.0
    %264 = vmatpush1.msra.mxu0 %v232
    %265 = vmatprep.subr.mxu0 0.0
    %266 = vmatpush1.msra.mxu0 %v231
    %267 = vmatprep.subr.mxu0 0.0
    %268 = vmatpush1.msra.mxu0 %v230
    %269 = vmatprep.subr.mxu0 0.0
    %270 = vmatpush1.msra.mxu0 %v229
    %271 = vmatprep.subr.mxu0 0.0
    %272 = vmatpush1.msra.mxu0 %v228
    %273 = vmatprep.subr.mxu0 0.0
    %274 = vmatpush1.msra.mxu0 %v227
    %275 = vmatprep.subr.mxu0 0.0
    %276 = vmatpush1.msra.mxu0 %v226
    %277 = vmatprep.subr.mxu0 0.0
    %278 = vmatpush1.msra.mxu0 %v225
    %279 = vmatprep.subr.mxu0 0.0
    %280 = vmatpush1.msra.mxu0 %v224
    %281 = vmatprep.subr.mxu0 0.0
    %282 = vmatpush2.msra.mxu0 0.0
    %283 = vmatprep.subr.mxu0 0.0
    %284 = vmatpush2.msra.mxu0 0.0
    %285 = vmatprep.subr.mxu0 0.0
    %286 = vmatpush2.msra.mxu0 0.0
    %287 = vmatprep.subr.mxu0 0.0
    %288 = vmatpush2.msra.mxu0 0.0
    %289 = vmatprep.subr.mxu0 0.0
    %290 = vmatpush2.msra.mxu0 0.0
    %291 = vmatprep.subr.mxu0 0.0
    %292 = vmatpush2.msra.mxu0 0.0
    %293 = vmatprep.subr.mxu0 0.0
    %294 = vmatpush2.msra.mxu0 0.0
    %295 = vmatprep.subr.mxu0 0.0
    %296 = vmatpush2.msra.mxu0 0.0
    %297 = vmatprep.subr.mxu0 0.0
    %298 = vmatpush2.msra.mxu0 0.0
    %299 = vmatprep.subr.mxu0 0.0
    %300 = vmatpush2.msra.mxu0 0.0
    %301 = vmatprep.subr.mxu0 0.0
    %302 = vmatpush2.msra.mxu0 0.0
    %303 = vmatprep.subr.mxu0 0.0
    %304 = vmatpush2.msra.mxu0 0.0
    %305 = vmatprep.subr.mxu0 0.0
    %306 = vmatpush2.msra.mxu0 0.0
    %307 = vmatprep.subr.mxu0 0.0
    %308 = vmatpush2.msra.mxu0 0.0
    %309 = vmatprep.subr.mxu0 0.0
    %310 = vmatpush2.msra.mxu0 0.0
    %311 = vmatprep.subr.mxu0 0.0
    %312 = vmatpush2.msra.mxu0 0.0
    %313 = vmatprep.mubr.f32.mxu0 0.0
    %314 = vmatmul.mubr.f32.gmra.mxu0 %v240
    %v315 = vpop.f32.mrf.mxu0
    %v316 = vadd.f32 %v247, %v315
    %v317 = vpop.f32.mrf.mxu0
    %318 = vdwg.mxu0
    %319 = vst [vmem:[#allocation2] sm:$0xff] %v316
    %v320 = vld [vmem:[#allocation2] sm:$0xff]
    %321 = vst [vmem:[#allocation6] sm:$0xff] %v320
    // Predicated region
    $region18: #{rectangle_net_apply.1} parent=1 // pred_check
      _
    $region19: #{rectangle_net_apply.1} parent=1 // pred_check_branch
      %323 = sbr.rel (0) target = $region21
    $region20: #{rectangle_net_apply.1} parent=1 // pred_region
      %s325 = ssub.s32 128, 128
      %326 = vsyncadd [#allocation5], %s325
      %s328 = sshll.u32 [#allocation6], 4
      %s329 = int_to_ptr.vmem [resolvable:$true] %s328
      %331 = dma.vmem_to_hbm [thread:$0]  %s329, 128, %s3, [#allocation5]
    $region21: #{rectangle_net_apply.1} parent=1 // pred_fallthru
      _
    // Predicated region
    $region22: #{rectangle_net_apply.1} parent=1 // pred_check
      _
    $region23: #{rectangle_net_apply.1} parent=1 // pred_check_branch
      %333 = sbr.rel (0) target = $region25
    $region24: #{rectangle_net_apply.1} parent=1 // pred_region
      %334 = dma.done [#allocation5], 128
    $region25: #{rectangle_net_apply.1} parent=1 // pred_fallthru
      _
    %335 = vsyncpa [#allocation4], 1
    %336 = vsyncpa [#allocation5], 1

</llo_original>
